<compile_context>
chip_gen: v7x
topology: tpu7x:2x2x1
jax: 0.10.0
libtpu: 0.0.40
codegen_flags: <defaults>
</compile_context>

<pallas_src>
import functools

import jax
import jax.numpy as jnp
import numpy as np
from jax.experimental import pallas as pl
from jax.experimental.pallas import tpu as pltpu


def _sigmoid(x):
    # exp -> EUP, approx reciprocal -> EUP; keeps the VALU slot free.
    return pl.reciprocal(1.0 + jnp.exp(-x), approx=True)


def actor_kernel(x_ref, w1_ref, w2_ref, w3_ref, o_ref, *, grid_dimension):
    """Fused Actor forward for one batch tile.

    x_ref  : VMEM (TB, S)        -- state tile
    w1_ref : VMEM (S, 32)        -- resident across grid steps
    w2_ref : VMEM (32, 64)
    w3_ref : VMEM (64, A_pad)    -- zero-padded to lane-dense width
    o_ref  : VMEM (TB, A_pad)
    """
    x = x_ref[...]
    h1 = _sigmoid(jnp.dot(x, w1_ref[...], preferred_element_type=jnp.float32))
    h2 = _sigmoid(jnp.dot(h1, w2_ref[...], preferred_element_type=jnp.float32))
    logits = jnp.dot(h2, w3_ref[...], preferred_element_type=jnp.float32)
    # gd / (1 + exp(clip(-x, -64, 64))) == gd * sigmoid(clip(x, -64, 64))
    o_ref[...] = grid_dimension * _sigmoid(jnp.clip(logits, -64.0, 64.0))


def actor_forward(state, w1, w2, w3, grid_dimension, *, tb=128):
    """Actor forward pass.

    state : (B, state_dim) f32
    w1    : (32, state_dim) f32   -- PyTorch layout (out, in)
    w2    : (64, 32)        f32
    w3    : (action_dim, 64) f32
    Returns (B, action_dim) f32.
    """
    B, S = state.shape
    A = w3.shape[0]

    # Kernel uses x @ W convention -> transpose to (in, out).
    w1_t = jnp.transpose(w1).astype(jnp.float32)          # (S, 32)
    w2_t = jnp.transpose(w2).astype(jnp.float32)          # (32, 64)
    w3_t = jnp.transpose(w3).astype(jnp.float32)          # (64, A)

    # Lane-dense output: pad action dim up to a multiple of 128 with zero cols.
    a_pad = max(128, ((A + 127) // 128) * 128)
    w3_p = jnp.zeros((w3_t.shape[0], a_pad), jnp.float32).at[:, :A].set(w3_t)

    # Pad batch to a multiple of the batch tile (zero rows, sliced off below).
    nb = pl.cdiv(B, tb)
    b_pad = nb * tb
    x = state.astype(jnp.float32)
    if b_pad != B:
        x = jnp.zeros((b_pad, S), jnp.float32).at[:B].set(x)

    kernel = functools.partial(actor_kernel, grid_dimension=float(grid_dimension))

    out = pl.pallas_call(
        kernel,
        out_shape=jax.ShapeDtypeStruct((b_pad, a_pad), jnp.float32),
        grid_spec=pltpu.PrefetchScalarGridSpec(
            num_scalar_prefetch=0,
            grid=(nb,),
            in_specs=[
                pl.BlockSpec((tb, S), lambda i: (i, 0)),        # state tile
                pl.BlockSpec((S, 32), lambda i: (0, 0)),        # W1 (resident)
                pl.BlockSpec((32, 64), lambda i: (0, 0)),       # W2 (resident)
                pl.BlockSpec((64, a_pad), lambda i: (0, 0)),    # W3 (resident)
            ],
            out_specs=pl.BlockSpec((tb, a_pad), lambda i: (i, 0)),
        ),
        compiler_params=pltpu.CompilerParams(
            dimension_semantics=("parallel",),   # shards batch grid on v7x megacore
        ),
    )(x, w1_t, w2_t, w3_p)

    return out[:B, :A]


def fanin_init_jax(key, size, fanin=None):
    """Mirror of PyTorch fanin_init: uniform(-1/sqrt(fanin), 1/sqrt(fanin)).
    size is (out_features, in_features); fanin defaults to size[0]."""
    fanin = fanin or size[0]
    v = 1.0 / np.sqrt(fanin)
    return jax.random.uniform(key, size, dtype=jnp.float32, minval=-v, maxval=v)


def actor_ref(state, w1, w2, w3, grid_dimension):
    """Pure-JAX reference (exact sigmoid / divide) for correctness checking."""
    h1 = jax.nn.sigmoid(state @ w1.T)
    h2 = jax.nn.sigmoid(h1 @ w2.T)
    logits = h2 @ w3.T
    return grid_dimension / (1.0 + jnp.exp(jnp.clip(-logits, -64.0, 64.0)))


if __name__ == "__main__":
    # Small, forward-consistent shapes.
    B = 8
    STATE_DIM = 4
    ACTION_DIM = 2
    GRID_DIMENSION = 10.0

    key = jax.random.PRNGKey(0)
    k_x, k_w1, k_w2, k_w3 = jax.random.split(key, 4)

    # PyTorch weight layout (out, in); variance1/variance2 are unused in forward.
    w1 = fanin_init_jax(k_w1, (32, STATE_DIM))        # hidden1.weight
    w2 = fanin_init_jax(k_w2, (64, 32))               # hidden2.weight
    w3 = fanin_init_jax(k_w3, (ACTION_DIM, 64))       # output.weight

    state = jax.random.normal(k_x, (B, STATE_DIM), dtype=jnp.float32)

    out = actor_forward(state, w1, w2, w3, GRID_DIMENSION)
    out = jax.block_until_ready(out)

    ref = actor_ref(state, w1, w2, w3, GRID_DIMENSION)
    assert out.shape == (B, ACTION_DIM)
    # Tolerance accounts for the EUP approximate-reciprocal sigmoid path
    # (approx=True) vs the exact divide in the pure-JAX reference.
    np.testing.assert_allclose(np.asarray(out), np.asarray(ref), rtol=2e-2, atol=2e-2)

    print("KERNEL_OK")
</pallas_src>

<mosaic_0001>
module attributes {stable_mosaic.version = 11 : i64} {
  func.func @actor_kernel(%arg0: i32, %arg1: memref<128x4xf32, #tpu.memory_space<vmem>>, %arg2: memref<4x32xf32, #tpu.memory_space<vmem>>, %arg3: memref<32x64xf32, #tpu.memory_space<vmem>>, %arg4: memref<64x128xf32, #tpu.memory_space<vmem>>, %arg5: memref<128x128xf32, #tpu.memory_space<vmem>>) attributes {dimension_semantics = [#tpu.dimension_semantics<parallel>], iteration_bounds = array<i64: 1>, scalar_prefetch = 0 : i64, scratch_operands = 0 : i64, tpu.core_type = #tpu.core_type<tc>, window_params = [{transform_indices = @transform_0, window_bounds = array<i64: 128, 4>}, {pipeline_mode = #tpu.pipeline_mode<synchronous>, transform_indices = @transform_1, window_bounds = array<i64: 4, 32>}, {pipeline_mode = #tpu.pipeline_mode<synchronous>, transform_indices = @transform_2, window_bounds = array<i64: 32, 64>}, {pipeline_mode = #tpu.pipeline_mode<synchronous>, transform_indices = @transform_3, window_bounds = array<i64: 64, 128>}, {transform_indices = @transform_4, window_bounds = array<i64: 128, 128>}]} {
    %c0 = arith.constant 0 : index
    %c0_0 = arith.constant 0 : index
    %0 = vector.load %arg1[%c0, %c0_0] : memref<128x4xf32, #tpu.memory_space<vmem>>, vector<128x4xf32>
    %c0_1 = arith.constant 0 : index
    %c0_2 = arith.constant 0 : index
    %1 = vector.load %arg2[%c0_1, %c0_2] : memref<4x32xf32, #tpu.memory_space<vmem>>, vector<4x32xf32>
    %cst = arith.constant dense<0.000000e+00> : vector<128x32xf32>
    %2 = tpu.matmul %0, %1, %cst {dimension_numbers = #tpu.dot_dimension_numbers<[1], [0], [0], [1], [0, 0, 1, 1], [], []>} : vector<128x4xf32>, vector<4x32xf32>, vector<128x32xf32> -> vector<128x32xf32>
    %cst_3 = arith.constant 0.000000e+00 : f32
    %3 = vector.broadcast %cst_3 : f32 to vector<128x32xf32>
    %4 = arith.subf %3, %2 : vector<128x32xf32>
    %5 = math.exp %4 : vector<128x32xf32>
    %cst_4 = arith.constant 1.000000e+00 : f32
    %6 = vector.broadcast %cst_4 : f32 to vector<128x32xf32>
    %7 = arith.addf %6, %5 : vector<128x32xf32>
    %8 = tpu.reciprocal %7 {approx = true} : vector<128x32xf32> -> vector<128x32xf32>
    %c0_5 = arith.constant 0 : index
    %c0_6 = arith.constant 0 : index
    %9 = vector.load %arg3[%c0_5, %c0_6] : memref<32x64xf32, #tpu.memory_space<vmem>>, vector<32x64xf32>
    %cst_7 = arith.constant dense<0.000000e+00> : vector<128x64xf32>
    %10 = tpu.matmul %8, %9, %cst_7 {dimension_numbers = #tpu.dot_dimension_numbers<[1], [0], [0], [1], [0, 0, 1, 1], [], []>} : vector<128x32xf32>, vector<32x64xf32>, vector<128x64xf32> -> vector<128x64xf32>
    %cst_8 = arith.constant 0.000000e+00 : f32
    %11 = vector.broadcast %cst_8 : f32 to vector<128x64xf32>
    %12 = arith.subf %11, %10 : vector<128x64xf32>
    %13 = math.exp %12 : vector<128x64xf32>
    %cst_9 = arith.constant 1.000000e+00 : f32
    %14 = vector.broadcast %cst_9 : f32 to vector<128x64xf32>
    %15 = arith.addf %14, %13 : vector<128x64xf32>
    %16 = tpu.reciprocal %15 {approx = true} : vector<128x64xf32> -> vector<128x64xf32>
    %c0_10 = arith.constant 0 : index
    %c0_11 = arith.constant 0 : index
    %17 = vector.load %arg4[%c0_10, %c0_11] : memref<64x128xf32, #tpu.memory_space<vmem>>, vector<64x128xf32>
    %cst_12 = arith.constant dense<0.000000e+00> : vector<128x128xf32>
    %18 = tpu.matmul %16, %17, %cst_12 {dimension_numbers = #tpu.dot_dimension_numbers<[1], [0], [0], [1], [0, 0, 1, 1], [], []>} : vector<128x64xf32>, vector<64x128xf32>, vector<128x128xf32> -> vector<128x128xf32>
    %cst_13 = arith.constant -6.400000e+01 : f32
    %cst_14 = arith.constant 6.400000e+01 : f32
    %19 = vector.broadcast %cst_13 : f32 to vector<128x128xf32>
    %20 = arith.maximumf %19, %18 : vector<128x128xf32>
    %21 = vector.broadcast %cst_14 : f32 to vector<128x128xf32>
    %22 = arith.minimumf %21, %20 : vector<128x128xf32>
    %cst_15 = arith.constant 0.000000e+00 : f32
    %23 = vector.broadcast %cst_15 : f32 to vector<128x128xf32>
    %24 = arith.subf %23, %22 : vector<128x128xf32>
    %25 = math.exp %24 : vector<128x128xf32>
    %cst_16 = arith.constant 1.000000e+00 : f32
    %26 = vector.broadcast %cst_16 : f32 to vector<128x128xf32>
    %27 = arith.addf %26, %25 : vector<128x128xf32>
    %28 = tpu.reciprocal %27 {approx = true} : vector<128x128xf32> -> vector<128x128xf32>
    %cst_17 = arith.constant 1.000000e+01 : f32
    %29 = vector.broadcast %cst_17 : f32 to vector<128x128xf32>
    %30 = arith.mulf %29, %28 : vector<128x128xf32>
    %c0_18 = arith.constant 0 : index
    %c0_19 = arith.constant 0 : index
    %31 = vector.load %arg5[%c0_18, %c0_19] : memref<128x128xf32, #tpu.memory_space<vmem>>, vector<128x128xf32>
    tpu.vector_store %arg5[%c0_18, %c0_19], %30 {strides = array<i32>} : memref<128x128xf32, #tpu.memory_space<vmem>>, vector<128x128xf32>,
    return
  }
  func.func @transform_0(%arg0: i32) -> (i32, i32) {
    %c0_i32 = arith.constant 0 : i32
    %c0_i32_0 = arith.constant 0 : i32
    return %arg0, %c0_i32 : i32, i32
  }
  func.func @transform_1(%arg0: i32) -> (i32, i32) {
    %c0_i32 = arith.constant 0 : i32
    %c0_i32_0 = arith.constant 0 : i32
    %c0_i32_1 = arith.constant 0 : i32
    return %c0_i32, %c0_i32_0 : i32, i32
  }
  func.func @transform_2(%arg0: i32) -> (i32, i32) {
    %c0_i32 = arith.constant 0 : i32
    %c0_i32_0 = arith.constant 0 : i32
    %c0_i32_1 = arith.constant 0 : i32
    return %c0_i32, %c0_i32_0 : i32, i32
  }
  func.func @transform_3(%arg0: i32) -> (i32, i32) {
    %c0_i32 = arith.constant 0 : i32
    %c0_i32_0 = arith.constant 0 : i32
    %c0_i32_1 = arith.constant 0 : i32
    return %c0_i32, %c0_i32_0 : i32, i32
  }
  func.func @transform_4(%arg0: i32) -> (i32, i32) {
    %c0_i32 = arith.constant 0 : i32
    %c0_i32_0 = arith.constant 0 : i32
    return %arg0, %c0_i32 : i32, i32
  }
}

</mosaic_0001>

<llo_original>
// kernel: tpu_custom_call.1
$region0: #{tpu_custom_call.1}
  #allocation0 [shape = 'u32[]', space=smem, size = 0x4, offset = 0x4, fixed_abs, tag = 'smem constant byte address 0x4 - core index']
  #allocation1 [shape = 'u32[144,128]{1,0:T(1,128)}', space=vmem, size = 0x12000, scoped, tag = 'internal scratch']
  %s0 = inlined_call_operand.vmem [shape: f32[128,4], index: 0, kind: input, shape index: {}]
  %s1 = inlined_call_operand.vmem [shape: f32[4,32], index: 1, kind: input, shape index: {}]
  %s2 = inlined_call_operand.vmem [shape: f32[32,64], index: 2, kind: input, shape index: {}]
  %s3 = inlined_call_operand.vmem [shape: f32[64,128], index: 3, kind: input, shape index: {}]
  %s4 = inlined_call_operand.hbm [shape: f32[128,128], index: 4, kind: output, shape index: {}]
  %s5 = sld [smem:[#allocation0]]
  $region26: #{tpu_custom_call.1} parent=0
    _
  %s7 = ssub.s32 1, %s5
  %s8 = scalar_select 0, %s7, %s5
  $region1: #{tpu_custom_call.1} parent=0
    #allocation2 [shape = 'u8[65536]{0}', space=vmem, size = 0x10000, scoped, tag = 'output window, operand 0, single buffered']
    #allocation3 [shape = 's32[1]{0}', space=sflag, size = 0x4, scoped, tag = 'scoped memory for tpu_custom_call.1']
    %9 = vsyncpa [#allocation3], 0
    // Predicated region
    $region2: #{tpu_custom_call.1} parent=1 // pred_check
      _
    $region3: #{tpu_custom_call.1} parent=1 // pred_check_branch
      %11 = sbr.rel (0) target = $region5
    $region4: #{tpu_custom_call.1} parent=1 // pred_region
      _
    $region5: #{tpu_custom_call.1} parent=1 // pred_fallthru
      _
    // Predicated region
    $region6: #{tpu_custom_call.1} parent=1 // pred_check
      _
    $region7: #{tpu_custom_call.1} parent=1 // pred_check_branch
      %13 = sbr.rel (0) target = $region9
    $region8: #{tpu_custom_call.1} parent=1 // pred_region
      _
    $region9: #{tpu_custom_call.1} parent=1 // pred_fallthru
      _
    // Predicated region
    $region10: #{tpu_custom_call.1} parent=1 // pred_check
      _
    $region11: #{tpu_custom_call.1} parent=1 // pred_check_branch
      %15 = sbr.rel (0) target = $region13
    $region12: #{tpu_custom_call.1} parent=1 // pred_region
      _
    $region13: #{tpu_custom_call.1} parent=1 // pred_fallthru
      _
    // Predicated region
    $region14: #{tpu_custom_call.1} parent=1 // pred_check
      _
    $region15: #{tpu_custom_call.1} parent=1 // pred_check_branch
      %17 = sbr.rel (0) target = $region17
    $region16: #{tpu_custom_call.1} parent=1 // pred_region
      _
    $region17: #{tpu_custom_call.1} parent=1 // pred_fallthru
      _
    %v18 = vld [vmem:[%s0] sm:$0xff]
    %v19 = vld [vmem:[%s0 + $0x8] sm:$0xff]
    %v20 = vld [vmem:[%s0 + $0x10] sm:$0xff]
    %v21 = vld [vmem:[%s0 + $0x18] sm:$0xff]
    %v22 = vld [vmem:[%s0 + $0x20] sm:$0xff]
    %v23 = vld [vmem:[%s0 + $0x28] sm:$0xff]
    %v24 = vld [vmem:[%s0 + $0x30] sm:$0xff]
    %v25 = vld [vmem:[%s0 + $0x38] sm:$0xff]
    %v26 = vld [vmem:[%s0 + $0x40] sm:$0xff]
    %v27 = vld [vmem:[%s0 + $0x48] sm:$0xff]
    %v28 = vld [vmem:[%s0 + $0x50] sm:$0xff]
    %v29 = vld [vmem:[%s0 + $0x58] sm:$0xff]
    %v30 = vld [vmem:[%s0 + $0x60] sm:$0xff]
    %v31 = vld [vmem:[%s0 + $0x68] sm:$0xff]
    %v32 = vld [vmem:[%s0 + $0x70] sm:$0xff]
    %v33 = vld [vmem:[%s0 + $0x78] sm:$0xff]
    %v34 = vld [vmem:[%s1] sm:$0xf]
    %vm35 = vcmask 31744
    %v37 = vsel %vm35, %v18, 0
    %v40 = vsel %vm35, %v19, 0
    %v43 = vsel %vm35, %v20, 0
    %v46 = vsel %vm35, %v21, 0
    %v49 = vsel %vm35, %v22, 0
    %v52 = vsel %vm35, %v23, 0
    %v55 = vsel %vm35, %v24, 0
    %v58 = vsel %vm35, %v25, 0
    %v61 = vsel %vm35, %v26, 0
    %v64 = vsel %vm35, %v27, 0
    %v67 = vsel %vm35, %v28, 0
    %v70 = vsel %vm35, %v29, 0
    %v73 = vsel %vm35, %v30, 0
    %v76 = vsel %vm35, %v31, 0
    %v79 = vsel %vm35, %v32, 0
    %v82 = vsel %vm35, %v33, 0
    %vm84 = vcmask 1043456
    %v86 = vsel %vm84, %v34, 0
    %88 = vmatprep.subr.mxu0 0.0
    %89 = vmatpush1.msra.mxu0 %v86
    %90 = vmatprep.subr.mxu0 0.0
    %91 = vmatpush1.msra.mxu0 0.0
    %92 = vmatprep.subr.mxu0 0.0
    %93 = vmatpush1.msra.mxu0 0.0
    %94 = vmatprep.subr.mxu0 0.0
    %95 = vmatpush1.msra.mxu0 0.0
    %96 = vmatprep.subr.mxu0 0.0
    %97 = vmatpush1.msra.mxu0 0.0
    %98 = vmatprep.subr.mxu0 0.0
    %99 = vmatpush1.msra.mxu0 0.0
    %100 = vmatprep.subr.mxu0 0.0
    %101 = vmatpush1.msra.mxu0 0.0
    %102 = vmatprep.subr.mxu0 0.0
    %103 = vmatpush1.msra.mxu0 0.0
    %104 = vmatprep.subr.mxu0 0.0
    %105 = vmatpush1.msra.mxu0 0.0
    %106 = vmatprep.subr.mxu0 0.0
    %107 = vmatpush1.msra.mxu0 0.0
    %108 = vmatprep.subr.mxu0 0.0
    %109 = vmatpush1.msra.mxu0 0.0
    %110 = vmatprep.subr.mxu0 0.0
    %111 = vmatpush1.msra.mxu0 0.0
    %112 = vmatprep.subr.mxu0 0.0
    %113 = vmatpush1.msra.mxu0 0.0
    %114 = vmatprep.subr.mxu0 0.0
    %115 = vmatpush1.msra.mxu0 0.0
    %116 = vmatprep.subr.mxu0 0.0
    %117 = vmatpush1.msra.mxu0 0.0
    %118 = vmatprep.subr.mxu0 0.0
    %119 = vmatpush1.msra.mxu0 0.0
    %120 = vmatprep.subr.mxu0 0.0
    %121 = vmatpush1.msra.mxu0 0.0
    %122 = vmatprep.subr.mxu0 0.0
    %123 = vmatpush1.msra.mxu0 0.0
    %124 = vmatprep.subr.mxu0 0.0
    %125 = vmatpush1.msra.mxu0 0.0
    %126 = vmatprep.subr.mxu0 0.0
    %127 = vmatpush1.msra.mxu0 0.0
    %128 = vmatprep.subr.mxu0 0.0
    %129 = vmatpush1.msra.mxu0 0.0
    %130 = vmatprep.subr.mxu0 0.0
    %131 = vmatpush1.msra.mxu0 0.0
    %132 = vmatprep.subr.mxu0 0.0
    %133 = vmatpush1.msra.mxu0 0.0
    %134 = vmatprep.subr.mxu0 0.0
    %135 = vmatpush1.msra.mxu0 0.0
    %136 = vmatprep.subr.mxu0 0.0
    %137 = vmatpush1.msra.mxu0 0.0
    %138 = vmatprep.subr.mxu0 0.0
    %139 = vmatpush1.msra.mxu0 0.0
    %140 = vmatprep.subr.mxu0 0.0
    %141 = vmatpush1.msra.mxu0 0.0
    %142 = vmatprep.subr.mxu0 0.0
    %143 = vmatpush1.msra.mxu0 0.0
    %144 = vmatprep.subr.mxu0 0.0
    %145 = vmatpush1.msra.mxu0 0.0
    %146 = vmatprep.subr.mxu0 0.0
    %147 = vmatpush1.msra.mxu0 0.0
    %148 = vmatprep.subr.mxu0 0.0
    %149 = vmatpush1.msra.mxu0 0.0
    %150 = vmatprep.subr.mxu0 0.0
    %151 = vmatpush1.msra.mxu0 0.0
    %152 = vmatprep.mubr.f32.mxu0 0.0
    %153 = vmatmul.mubr.f32.gmra.mrb[0].mxu0 %v37
    %v154 = vpop.f32.mrb[0].mxu0
    %v155 = vadd.f32 0.0, %v154
    %v156 = vpop.f32.mrb[0].mxu0
    %157 = vmatprep.mubr.f32.mxu0 0.0
    %158 = vmatmul.mubr.f32.gmra.mrb[0].mxu0 %v40
    %v159 = vpop.f32.mrb[0].mxu0
    %v160 = vadd.f32 0.0, %v159
    %v161 = vpop.f32.mrb[0].mxu0
    %162 = vmatprep.mubr.f32.mxu0 0.0
    %163 = vmatmul.mubr.f32.gmra.mrb[0].mxu0 %v43
    %v164 = vpop.f32.mrb[0].mxu0
    %v165 = vadd.f32 0.0, %v164
    %v166 = vpop.f32.mrb[0].mxu0
    %167 = vmatprep.mubr.f32.mxu0 0.0
    %168 = vmatmul.mubr.f32.gmra.mrb[0].mxu0 %v46
    %v169 = vpop.f32.mrb[0].mxu0
    %v170 = vadd.f32 0.0, %v169
    %v171 = vpop.f32.mrb[0].mxu0
    %172 = vmatprep.mubr.f32.mxu0 0.0
    %173 = vmatmul.mubr.f32.gmra.mrb[0].mxu0 %v49
    %v174 = vpop.f32.mrb[0].mxu0
    %v175 = vadd.f32 0.0, %v174
    %v176 = vpop.f32.mrb[0].mxu0
    %177 = vmatprep.mubr.f32.mxu0 0.0
    %178 = vmatmul.mubr.f32.gmra.mrb[0].mxu0 %v52
    %v179 = vpop.f32.mrb[0].mxu0
    %v180 = vadd.f32 0.0, %v179
    %v181 = vpop.f32.mrb[0].mxu0
    %182 = vmatprep.mubr.f32.mxu0 0.0
    %183 = vmatmul.mubr.f32.gmra.mrb[0].mxu0 %v55
    %v184 = vpop.f32.mrb[0].mxu0
    %v185 = vadd.f32 0.0, %v184
    %v186 = vpop.f32.mrb[0].mxu0
    %187 = vmatprep.mubr.f32.mxu0 0.0
    %188 = vmatmul.mubr.f32.gmra.mrb[0].mxu0 %v58
    %v189 = vpop.f32.mrb[0].mxu0
    %v190 = vadd.f32 0.0, %v189
    %v191 = vpop.f32.mrb[0].mxu0
    %192 = vmatprep.mubr.f32.mxu0 0.0
    %193 = vmatmul.mubr.f32.gmra.mrb[0].mxu0 %v61
    %v194 = vpop.f32.mrb[0].mxu0
    %v195 = vadd.f32 0.0, %v194
    %v196 = vpop.f32.mrb[0].mxu0
    %197 = vmatprep.mubr.f32.mxu0 0.0
    %198 = vmatmul.mubr.f32.gmra.mrb[0].mxu0 %v64
    %v199 = vpop.f32.mrb[0].mxu0
    %v200 = vadd.f32 0.0, %v199
    %v201 = vpop.f32.mrb[0].mxu0
    %202 = vmatprep.mubr.f32.mxu0 0.0
    %203 = vmatmul.mubr.f32.gmra.mrb[0].mxu0 %v67
    %v204 = vpop.f32.mrb[0].mxu0
    %v205 = vadd.f32 0.0, %v204
    %v206 = vpop.f32.mrb[0].mxu0
    %207 = vmatprep.mubr.f32.mxu0 0.0
    %208 = vmatmul.mubr.f32.gmra.mrb[0].mxu0 %v70
    %v209 = vpop.f32.mrb[0].mxu0
    %v210 = vadd.f32 0.0, %v209
    %v211 = vpop.f32.mrb[0].mxu0
    %212 = vmatprep.mubr.f32.mxu0 0.0
    %213 = vmatmul.mubr.f32.gmra.mrb[0].mxu0 %v73
    %v214 = vpop.f32.mrb[0].mxu0
    %v215 = vadd.f32 0.0, %v214
    %v216 = vpop.f32.mrb[0].mxu0
    %217 = vmatprep.mubr.f32.mxu0 0.0
    %218 = vmatmul.mubr.f32.gmra.mrb[0].mxu0 %v76
    %v219 = vpop.f32.mrb[0].mxu0
    %v220 = vadd.f32 0.0, %v219
    %v221 = vpop.f32.mrb[0].mxu0
    %222 = vmatprep.mubr.f32.mxu0 0.0
    %223 = vmatmul.mubr.f32.gmra.mrb[0].mxu0 %v79
    %v224 = vpop.f32.mrb[0].mxu0
    %v225 = vadd.f32 0.0, %v224
    %v226 = vpop.f32.mrb[0].mxu0
    %227 = vmatprep.mubr.f32.mxu0 0.0
    %228 = vmatmul.mubr.f32.gmra.mrb[0].mxu0 %v82
    %v229 = vpop.f32.mrb[0].mxu0
    %v230 = vadd.f32 0.0, %v229
    %v231 = vpop.f32.mrb[0].mxu0
    %232 = vdwg.mxu0
    %v233 = vsub.f32 0.0, %v155
    %v234 = vsub.f32 0.0, %v160
    %v235 = vsub.f32 0.0, %v165
    %v236 = vsub.f32 0.0, %v170
    %v237 = vsub.f32 0.0, %v175
    %v238 = vsub.f32 0.0, %v180
    %v239 = vsub.f32 0.0, %v185
    %v240 = vsub.f32 0.0, %v190
    %v241 = vsub.f32 0.0, %v195
    %v242 = vsub.f32 0.0, %v200
    %v243 = vsub.f32 0.0, %v205
    %v244 = vsub.f32 0.0, %v210
    %v245 = vsub.f32 0.0, %v215
    %v246 = vsub.f32 0.0, %v220
    %v247 = vsub.f32 0.0, %v225
    %v248 = vsub.f32 0.0, %v230
    %v249 = vmul.f32 %v233, 1.442695
    %v250 = vpow.pop %v249
    %v251 = vmul.f32 %v234, 1.442695
    %v252 = vpow.pop %v251
    %v253 = vmul.f32 %v235, 1.442695
    %v254 = vpow.pop %v253
    %v255 = vmul.f32 %v236, 1.442695
    %v256 = vpow.pop %v255
    %v257 = vmul.f32 %v237, 1.442695
    %v258 = vpow.pop %v257
    %v259 = vmul.f32 %v238, 1.442695
    %v260 = vpow.pop %v259
    %v261 = vmul.f32 %v239, 1.442695
    %v262 = vpow.pop %v261
    %v263 = vmul.f32 %v240, 1.442695
    %v264 = vpow.pop %v263
    %v265 = vmul.f32 %v241, 1.442695
    %v266 = vpow.pop %v265
    %v267 = vmul.f32 %v242, 1.442695
    %v268 = vpow.pop %v267
    %v269 = vmul.f32 %v243, 1.442695
    %v270 = vpow.pop %v269
    %v271 = vmul.f32 %v244, 1.442695
    %v272 = vpow.pop %v271
    %v273 = vmul.f32 %v245, 1.442695
    %v274 = vpow.pop %v273
    %v275 = vmul.f32 %v246, 1.442695
    %v276 = vpow.pop %v275
    %v277 = vmul.f32 %v247, 1.442695
    %v278 = vpow.pop %v277
    %v279 = vmul.f32 %v248, 1.442695
    %v280 = vpow.pop %v279
    %v281 = vadd.f32 %v250, 1.0
    %v282 = vadd.f32 %v252, 1.0
    %v283 = vadd.f32 %v254, 1.0
    %v284 = vadd.f32 %v256, 1.0
    %v285 = vadd.f32 %v258, 1.0
    %v286 = vadd.f32 %v260, 1.0
    %v287 = vadd.f32 %v262, 1.0
    %v288 = vadd.f32 %v264, 1.0
    %v289 = vadd.f32 %v266, 1.0
    %v290 = vadd.f32 %v268, 1.0
    %v291 = vadd.f32 %v270, 1.0
    %v292 = vadd.f32 %v272, 1.0
    %v293 = vadd.f32 %v274, 1.0
    %v294 = vadd.f32 %v276, 1.0
    %v295 = vadd.f32 %v278, 1.0
    %v296 = vadd.f32 %v280, 1.0
    %v297 = vrcp.pop %v281
    %v298 = vrcp.pop %v282
    %v299 = vrcp.pop %v283
    %v300 = vrcp.pop %v284
    %v301 = vrcp.pop %v285
    %v302 = vrcp.pop %v286
    %v303 = vrcp.pop %v287
    %v304 = vrcp.pop %v288
    %v305 = vrcp.pop %v289
    %v306 = vrcp.pop %v290
    %v307 = vrcp.pop %v291
    %v308 = vrcp.pop %v292
    %v309 = vrcp.pop %v293
    %v310 = vrcp.pop %v294
    %v311 = vrcp.pop %v295
    %v312 = vrcp.pop %v296
    %v313 = vld [vmem:[%s2] sm:$0xff]
    %v314 = vld [vmem:[%s2 + $0x8] sm:$0xff]
    %v315 = vld [vmem:[%s2 + $0x10] sm:$0xff]
    %v316 = vld [vmem:[%s2 + $0x18] sm:$0xff]
    %vm317 = vcmask 261120
    %v319 = vsel %vm317, %v297, 0
    %v322 = vsel %vm317, %v298, 0
    %v325 = vsel %vm317, %v299, 0
    %v328 = vsel %vm317, %v300, 0
    %v331 = vsel %vm317, %v301, 0
    %v334 = vsel %vm317, %v302, 0
    %v337 = vsel %vm317, %v303, 0
    %v340 = vsel %vm317, %v304, 0
    %v343 = vsel %vm317, %v305, 0
    %v346 = vsel %vm317, %v306, 0
    %v349 = vsel %vm317, %v307, 0
    %v352 = vsel %vm317, %v308, 0
    %v355 = vsel %vm317, %v309, 0
    %v358 = vsel %vm317, %v310, 0
    %v361 = vsel %vm317, %v311, 0
    %v364 = vsel %vm317, %v312, 0
    %366 = vmatprep.subr.mxu0 0.0
    %367 = vmatpush1.msra.mxu0 %v313
    %368 = vmatprep.subr.mxu0 0.0
    %369 = vmatpush1.msra.mxu0 %v314
    %370 = vmatprep.subr.mxu0 0.0
    %371 = vmatpush1.msra.mxu0 %v315
    %372 = vmatprep.subr.mxu0 0.0
    %373 = vmatpush1.msra.mxu0 %v316
    %374 = vmatprep.subr.mxu0 0.0
    %375 = vmatpush1.msra.mxu0 0.0
    %376 = vmatprep.subr.mxu0 0.0
    %377 = vmatpush1.msra.mxu0 0.0
    %378 = vmatprep.subr.mxu0 0.0
    %379 = vmatpush1.msra.mxu0 0.0
    %380 = vmatprep.subr.mxu0 0.0
    %381 = vmatpush1.msra.mxu0 0.0
    %382 = vmatprep.subr.mxu0 0.0
    %383 = vmatpush1.msra.mxu0 0.0
    %384 = vmatprep.subr.mxu0 0.0
    %385 = vmatpush1.msra.mxu0 0.0
    %386 = vmatprep.subr.mxu0 0.0
    %387 = vmatpush1.msra.mxu0 0.0
    %388 = vmatprep.subr.mxu0 0.0
    %389 = vmatpush1.msra.mxu0 0.0
    %390 = vmatprep.subr.mxu0 0.0
    %391 = vmatpush1.msra.mxu0 0.0
    %392 = vmatprep.subr.mxu0 0.0
    %393 = vmatpush1.msra.mxu0 0.0
    %394 = vmatprep.subr.mxu0 0.0
    %395 = vmatpush1.msra.mxu0 0.0
    %396 = vmatprep.subr.mxu0 0.0
    %397 = vmatpush1.msra.mxu0 0.0
    %398 = vmatprep.subr.mxu0 0.0
    %399 = vmatpush1.msra.mxu0 0.0
    %400 = vmatprep.subr.mxu0 0.0
    %401 = vmatpush1.msra.mxu0 0.0
    %402 = vmatprep.subr.mxu0 0.0
    %403 = vmatpush1.msra.mxu0 0.0
    %404 = vmatprep.subr.mxu0 0.0
    %405 = vmatpush1.msra.mxu0 0.0
    %406 = vmatprep.subr.mxu0 0.0
    %407 = vmatpush1.msra.mxu0 0.0
    %408 = vmatprep.subr.mxu0 0.0
    %409 = vmatpush1.msra.mxu0 0.0
    %410 = vmatprep.subr.mxu0 0.0
    %411 = vmatpush1.msra.mxu0 0.0
    %412 = vmatprep.subr.mxu0 0.0
    %413 = vmatpush1.msra.mxu0 0.0
    %414 = vmatprep.subr.mxu0 0.0
    %415 = vmatpush1.msra.mxu0 0.0
    %416 = vmatprep.subr.mxu0 0.0
    %417 = vmatpush1.msra.mxu0 0.0
    %418 = vmatprep.subr.mxu0 0.0
    %419 = vmatpush1.msra.mxu0 0.0
    %420 = vmatprep.subr.mxu0 0.0
    %421 = vmatpush1.msra.mxu0 0.0
    %422 = vmatprep.subr.mxu0 0.0
    %423 = vmatpush1.msra.mxu0 0.0
    %424 = vmatprep.subr.mxu0 0.0
    %425 = vmatpush1.msra.mxu0 0.0
    %426 = vmatprep.subr.mxu0 0.0
    %427 = vmatpush1.msra.mxu0 0.0
    %428 = vmatprep.subr.mxu0 0.0
    %429 = vmatpush1.msra.mxu0 0.0
    %430 = vmatprep.mubr.f32.mxu0 0.0
    %431 = vmatmul.mubr.f32.gmra.mrb[0].mxu0 %v319
    %v432 = vpop.f32.mrb[0].mxu0
    %v433 = vadd.f32 0.0, %v432
    %v434 = vpop.f32.mrb[0].mxu0
    %435 = vmatprep.mubr.f32.mxu0 0.0
    %436 = vmatmul.mubr.f32.gmra.mrb[0].mxu0 %v322
    %v437 = vpop.f32.mrb[0].mxu0
    %v438 = vadd.f32 0.0, %v437
    %v439 = vpop.f32.mrb[0].mxu0
    %440 = vmatprep.mubr.f32.mxu0 0.0
    %441 = vmatmul.mubr.f32.gmra.mrb[0].mxu0 %v325
    %v442 = vpop.f32.mrb[0].mxu0
    %v443 = vadd.f32 0.0, %v442
    %v444 = vpop.f32.mrb[0].mxu0
    %445 = vmatprep.mubr.f32.mxu0 0.0
    %446 = vmatmul.mubr.f32.gmra.mrb[0].mxu0 %v328
    %v447 = vpop.f32.mrb[0].mxu0
    %v448 = vadd.f32 0.0, %v447
    %v449 = vpop.f32.mrb[0].mxu0
    %450 = vmatprep.mubr.f32.mxu0 0.0
    %451 = vmatmul.mubr.f32.gmra.mrb[0].mxu0 %v331
    %v452 = vpop.f32.mrb[0].mxu0
    %v453 = vadd.f32 0.0, %v452
    %v454 = vpop.f32.mrb[0].mxu0
    %455 = vmatprep.mubr.f32.mxu0 0.0
    %456 = vmatmul.mubr.f32.gmra.mrb[0].mxu0 %v334
    %v457 = vpop.f32.mrb[0].mxu0
    %v458 = vadd.f32 0.0, %v457
    %v459 = vpop.f32.mrb[0].mxu0
    %460 = vmatprep.mubr.f32.mxu0 0.0
    %461 = vmatmul.mubr.f32.gmra.mrb[0].mxu0 %v337
    %v462 = vpop.f32.mrb[0].mxu0
    %v463 = vadd.f32 0.0, %v462
    %v464 = vpop.f32.mrb[0].mxu0
    %465 = vmatprep.mubr.f32.mxu0 0.0
    %466 = vmatmul.mubr.f32.gmra.mrb[0].mxu0 %v340
    %v467 = vpop.f32.mrb[0].mxu0
    %v468 = vadd.f32 0.0, %v467
    %v469 = vpop.f32.mrb[0].mxu0
    %470 = vmatprep.mubr.f32.mxu0 0.0
    %471 = vmatmul.mubr.f32.gmra.mrb[0].mxu0 %v343
    %v472 = vpop.f32.mrb[0].mxu0
    %v473 = vadd.f32 0.0, %v472
    %v474 = vpop.f32.mrb[0].mxu0
    %475 = vmatprep.mubr.f32.mxu0 0.0
    %476 = vmatmul.mubr.f32.gmra.mrb[0].mxu0 %v346
    %v477 = vpop.f32.mrb[0].mxu0
    %v478 = vadd.f32 0.0, %v477
    %v479 = vpop.f32.mrb[0].mxu0
    %480 = vmatprep.mubr.f32.mxu0 0.0
    %481 = vmatmul.mubr.f32.gmra.mrb[0].mxu0 %v349
    %v482 = vpop.f32.mrb[0].mxu0
    %v483 = vadd.f32 0.0, %v482
    %v484 = vpop.f32.mrb[0].mxu0
    %485 = vmatprep.mubr.f32.mxu0 0.0
    %486 = vmatmul.mubr.f32.gmra.mrb[0].mxu0 %v352
    %v487 = vpop.f32.mrb[0].mxu0
    %v488 = vadd.f32 0.0, %v487
    %v489 = vpop.f32.mrb[0].mxu0
    %490 = vmatprep.mubr.f32.mxu0 0.0
    %491 = vmatmul.mubr.f32.gmra.mrb[0].mxu0 %v355
    %v492 = vpop.f32.mrb[0].mxu0
    %v493 = vadd.f32 0.0, %v492
    %v494 = vpop.f32.mrb[0].mxu0
    %495 = vmatprep.mubr.f32.mxu0 0.0
    %496 = vmatmul.mubr.f32.gmra.mrb[0].mxu0 %v358
    %v497 = vpop.f32.mrb[0].mxu0
    %v498 = vadd.f32 0.0, %v497
    %v499 = vpop.f32.mrb[0].mxu0
    %500 = vmatprep.mubr.f32.mxu0 0.0
    %501 = vmatmul.mubr.f32.gmra.mrb[0].mxu0 %v361
    %v502 = vpop.f32.mrb[0].mxu0
    %v503 = vadd.f32 0.0, %v502
    %v504 = vpop.f32.mrb[0].mxu0
    %505 = vmatprep.mubr.f32.mxu0 0.0
    %506 = vmatmul.mubr.f32.gmra.mrb[0].mxu0 %v364
    %v507 = vpop.f32.mrb[0].mxu0
    %v508 = vadd.f32 0.0, %v507
    %v509 = vpop.f32.mrb[0].mxu0
    %510 = vdwg.mxu0
    %v511 = vsub.f32 0.0, %v433
    %v512 = vsub.f32 0.0, %v438
    %v513 = vsub.f32 0.0, %v443
    %v514 = vsub.f32 0.0, %v448
    %v515 = vsub.f32 0.0, %v453
    %v516 = vsub.f32 0.0, %v458
    %v517 = vsub.f32 0.0, %v463
    %v518 = vsub.f32 0.0, %v468
    %v519 = vsub.f32 0.0, %v473
    %v520 = vsub.f32 0.0, %v478
    %v521 = vsub.f32 0.0, %v483
    %v522 = vsub.f32 0.0, %v488
    %v523 = vsub.f32 0.0, %v493
    %v524 = vsub.f32 0.0, %v498
    %v525 = vsub.f32 0.0, %v503
    %v526 = vsub.f32 0.0, %v508
    %v527 = vmul.f32 %v511, 1.442695
    %v528 = vpow.pop %v527
    %v529 = vmul.f32 %v512, 1.442695
    %v530 = vpow.pop %v529
    %v531 = vmul.f32 %v513, 1.442695
    %v532 = vpow.pop %v531
    %v533 = vmul.f32 %v514, 1.442695
    %v534 = vpow.pop %v533
    %v535 = vmul.f32 %v515, 1.442695
    %v536 = vpow.pop %v535
    %v537 = vmul.f32 %v516, 1.442695
    %v538 = vpow.pop %v537
    %v539 = vmul.f32 %v517, 1.442695
    %v540 = vpow.pop %v539
    %v541 = vmul.f32 %v518, 1.442695
    %v542 = vpow.pop %v541
    %v543 = vmul.f32 %v519, 1.442695
    %v544 = vpow.pop %v543
    %v545 = vmul.f32 %v520, 1.442695
    %v546 = vpow.pop %v545
    %v547 = vmul.f32 %v521, 1.442695
    %v548 = vpow.pop %v547
    %v549 = vmul.f32 %v522, 1.442695
    %v550 = vpow.pop %v549
    %v551 = vmul.f32 %v523, 1.442695
    %v552 = vpow.pop %v551
    %v553 = vmul.f32 %v524, 1.442695
    %v554 = vpow.pop %v553
    %v555 = vmul.f32 %v525, 1.442695
    %v556 = vpow.pop %v555
    %v557 = vmul.f32 %v526, 1.442695
    %v558 = vpow.pop %v557
    %v559 = vadd.f32 %v528, 1.0
    %v560 = vadd.f32 %v530, 1.0
    %v561 = vadd.f32 %v532, 1.0
    %v562 = vadd.f32 %v534, 1.0
    %v563 = vadd.f32 %v536, 1.0
    %v564 = vadd.f32 %v538, 1.0
    %v565 = vadd.f32 %v540, 1.0
    %v566 = vadd.f32 %v542, 1.0
    %v567 = vadd.f32 %v544, 1.0
    %v568 = vadd.f32 %v546, 1.0
    %v569 = vadd.f32 %v548, 1.0
    %v570 = vadd.f32 %v550, 1.0
    %v571 = vadd.f32 %v552, 1.0
    %v572 = vadd.f32 %v554, 1.0
    %v573 = vadd.f32 %v556, 1.0
    %v574 = vadd.f32 %v558, 1.0
    %v575 = vrcp.pop %v559
    %v576 = vrcp.pop %v560
    %v577 = vrcp.pop %v561
    %v578 = vrcp.pop %v562
    %v579 = vrcp.pop %v563
    %v580 = vrcp.pop %v564
    %v581 = vrcp.pop %v565
    %v582 = vrcp.pop %v566
    %v583 = vrcp.pop %v567
    %v584 = vrcp.pop %v568
    %v585 = vrcp.pop %v569
    %v586 = vrcp.pop %v570
    %v587 = vrcp.pop %v571
    %v588 = vrcp.pop %v572
    %v589 = vrcp.pop %v573
    %v590 = vrcp.pop %v574
    %v591 = vld [vmem:[%s3] sm:$0xff]
    %v592 = vld [vmem:[%s3 + $0x8] sm:$0xff]
    %v593 = vld [vmem:[%s3 + $0x10] sm:$0xff]
    %v594 = vld [vmem:[%s3 + $0x18] sm:$0xff]
    %v595 = vld [vmem:[%s3 + $0x20] sm:$0xff]
    %v596 = vld [vmem:[%s3 + $0x28] sm:$0xff]
    %v597 = vld [vmem:[%s3 + $0x30] sm:$0xff]
    %v598 = vld [vmem:[%s3 + $0x38] sm:$0xff]
    %vm599 = vcmask 523264
    %v601 = vsel %vm599, %v575, 0
    %v604 = vsel %vm599, %v576, 0
    %v607 = vsel %vm599, %v577, 0
    %v610 = vsel %vm599, %v578, 0
    %v613 = vsel %vm599, %v579, 0
    %v616 = vsel %vm599, %v580, 0
    %v619 = vsel %vm599, %v581, 0
    %v622 = vsel %vm599, %v582, 0
    %v625 = vsel %vm599, %v583, 0
    %v628 = vsel %vm599, %v584, 0
    %v631 = vsel %vm599, %v585, 0
    %v634 = vsel %vm599, %v586, 0
    %v637 = vsel %vm599, %v587, 0
    %v640 = vsel %vm599, %v588, 0
    %v643 = vsel %vm599, %v589, 0
    %v646 = vsel %vm599, %v590, 0
    %648 = vmatprep.subr.mxu0 0.0
    %649 = vmatpush1.msra.mxu0 %v591
    %650 = vmatprep.subr.mxu0 0.0
    %651 = vmatpush1.msra.mxu0 %v592
    %652 = vmatprep.subr.mxu0 0.0
    %653 = vmatpush1.msra.mxu0 %v593
    %654 = vmatprep.subr.mxu0 0.0
    %655 = vmatpush1.msra.mxu0 %v594
    %656 = vmatprep.subr.mxu0 0.0
    %657 = vmatpush1.msra.mxu0 %v595
    %658 = vmatprep.subr.mxu0 0.0
    %659 = vmatpush1.msra.mxu0 %v596
    %660 = vmatprep.subr.mxu0 0.0
    %661 = vmatpush1.msra.mxu0 %v597
    %662 = vmatprep.subr.mxu0 0.0
    %663 = vmatpush1.msra.mxu0 %v598
    %664 = vmatprep.subr.mxu0 0.0
    %665 = vmatpush1.msra.mxu0 0.0
    %666 = vmatprep.subr.mxu0 0.0
    %667 = vmatpush1.msra.mxu0 0.0
    %668 = vmatprep.subr.mxu0 0.0
    %669 = vmatpush1.msra.mxu0 0.0
    %670 = vmatprep.subr.mxu0 0.0
    %671 = vmatpush1.msra.mxu0 0.0
    %672 = vmatprep.subr.mxu0 0.0
    %673 = vmatpush1.msra.mxu0 0.0
    %674 = vmatprep.subr.mxu0 0.0
    %675 = vmatpush1.msra.mxu0 0.0
    %676 = vmatprep.subr.mxu0 0.0
    %677 = vmatpush1.msra.mxu0 0.0
    %678 = vmatprep.subr.mxu0 0.0
    %679 = vmatpush1.msra.mxu0 0.0
    %680 = vmatprep.subr.mxu0 0.0
    %681 = vmatpush1.msra.mxu0 0.0
    %682 = vmatprep.subr.mxu0 0.0
    %683 = vmatpush1.msra.mxu0 0.0
    %684 = vmatprep.subr.mxu0 0.0
    %685 = vmatpush1.msra.mxu0 0.0
    %686 = vmatprep.subr.mxu0 0.0
    %687 = vmatpush1.msra.mxu0 0.0
    %688 = vmatprep.subr.mxu0 0.0
    %689 = vmatpush1.msra.mxu0 0.0
    %690 = vmatprep.subr.mxu0 0.0
    %691 = vmatpush1.msra.mxu0 0.0
    %692 = vmatprep.subr.mxu0 0.0
    %693 = vmatpush1.msra.mxu0 0.0
    %694 = vmatprep.subr.mxu0 0.0
    %695 = vmatpush1.msra.mxu0 0.0
    %696 = vmatprep.subr.mxu0 0.0
    %697 = vmatpush1.msra.mxu0 0.0
    %698 = vmatprep.subr.mxu0 0.0
    %699 = vmatpush1.msra.mxu0 0.0
    %700 = vmatprep.subr.mxu0 0.0
    %701 = vmatpush1.msra.mxu0 0.0
    %702 = vmatprep.subr.mxu0 0.0
    %703 = vmatpush1.msra.mxu0 0.0
    %704 = vmatprep.subr.mxu0 0.0
    %705 = vmatpush1.msra.mxu0 0.0
    %706 = vmatprep.subr.mxu0 0.0
    %707 = vmatpush1.msra.mxu0 0.0
    %708 = vmatprep.subr.mxu0 0.0
    %709 = vmatpush1.msra.mxu0 0.0
    %710 = vmatprep.subr.mxu0 0.0
    %711 = vmatpush1.msra.mxu0 0.0
    %712 = vmatprep.mubr.f32.mxu0 0.0
    %713 = vmatmul.mubr.f32.gmra.mrb[0].mxu0 %v601
    %v714 = vpop.f32.mrb[0].mxu0
    %v715 = vadd.f32 0.0, %v714
    %v716 = vpop.f32.mrb[0].mxu0
    %717 = vmatprep.mubr.f32.mxu0 0.0
    %718 = vmatmul.mubr.f32.gmra.mrb[0].mxu0 %v604
    %v719 = vpop.f32.mrb[0].mxu0
    %v720 = vadd.f32 0.0, %v719
    %v721 = vpop.f32.mrb[0].mxu0
    %722 = vmatprep.mubr.f32.mxu0 0.0
    %723 = vmatmul.mubr.f32.gmra.mrb[0].mxu0 %v607
    %v724 = vpop.f32.mrb[0].mxu0
    %v725 = vadd.f32 0.0, %v724
    %v726 = vpop.f32.mrb[0].mxu0
    %727 = vmatprep.mubr.f32.mxu0 0.0
    %728 = vmatmul.mubr.f32.gmra.mrb[0].mxu0 %v610
    %v729 = vpop.f32.mrb[0].mxu0
    %v730 = vadd.f32 0.0, %v729
    %v731 = vpop.f32.mrb[0].mxu0
    %732 = vmatprep.mubr.f32.mxu0 0.0
    %733 = vmatmul.mubr.f32.gmra.mrb[0].mxu0 %v613
    %v734 = vpop.f32.mrb[0].mxu0
    %v735 = vadd.f32 0.0, %v734
    %v736 = vpop.f32.mrb[0].mxu0
    %737 = vmatprep.mubr.f32.mxu0 0.0
    %738 = vmatmul.mubr.f32.gmra.mrb[0].mxu0 %v616
    %v739 = vpop.f32.mrb[0].mxu0
    %v740 = vadd.f32 0.0, %v739
    %v741 = vpop.f32.mrb[0].mxu0
    %742 = vmatprep.mubr.f32.mxu0 0.0
    %743 = vmatmul.mubr.f32.gmra.mrb[0].mxu0 %v619
    %v744 = vpop.f32.mrb[0].mxu0
    %v745 = vadd.f32 0.0, %v744
    %v746 = vpop.f32.mrb[0].mxu0
    %747 = vmatprep.mubr.f32.mxu0 0.0
    %748 = vmatmul.mubr.f32.gmra.mrb[0].mxu0 %v622
    %v749 = vpop.f32.mrb[0].mxu0
    %v750 = vadd.f32 0.0, %v749
    %v751 = vpop.f32.mrb[0].mxu0
    %752 = vmatprep.mubr.f32.mxu0 0.0
    %753 = vmatmul.mubr.f32.gmra.mrb[0].mxu0 %v625
    %v754 = vpop.f32.mrb[0].mxu0
    %v755 = vadd.f32 0.0, %v754
    %v756 = vpop.f32.mrb[0].mxu0
    %757 = vmatprep.mubr.f32.mxu0 0.0
    %758 = vmatmul.mubr.f32.gmra.mrb[0].mxu0 %v628
    %v759 = vpop.f32.mrb[0].mxu0
    %v760 = vadd.f32 0.0, %v759
    %v761 = vpop.f32.mrb[0].mxu0
    %762 = vmatprep.mubr.f32.mxu0 0.0
    %763 = vmatmul.mubr.f32.gmra.mrb[0].mxu0 %v631
    %v764 = vpop.f32.mrb[0].mxu0
    %v765 = vadd.f32 0.0, %v764
    %v766 = vpop.f32.mrb[0].mxu0
    %767 = vmatprep.mubr.f32.mxu0 0.0
    %768 = vmatmul.mubr.f32.gmra.mrb[0].mxu0 %v634
    %v769 = vpop.f32.mrb[0].mxu0
    %v770 = vadd.f32 0.0, %v769
    %v771 = vpop.f32.mrb[0].mxu0
    %772 = vmatprep.mubr.f32.mxu0 0.0
    %773 = vmatmul.mubr.f32.gmra.mrb[0].mxu0 %v637
    %v774 = vpop.f32.mrb[0].mxu0
    %v775 = vadd.f32 0.0, %v774
    %v776 = vpop.f32.mrb[0].mxu0
    %777 = vmatprep.mubr.f32.mxu0 0.0
    %778 = vmatmul.mubr.f32.gmra.mrb[0].mxu0 %v640
    %v779 = vpop.f32.mrb[0].mxu0
    %v780 = vadd.f32 0.0, %v779
    %v781 = vpop.f32.mrb[0].mxu0
    %782 = vmatprep.mubr.f32.mxu0 0.0
    %783 = vmatmul.mubr.f32.gmra.mrb[0].mxu0 %v643
    %v784 = vpop.f32.mrb[0].mxu0
    %v785 = vadd.f32 0.0, %v784
    %v786 = vpop.f32.mrb[0].mxu0
    %787 = vmatprep.mubr.f32.mxu0 0.0
    %788 = vmatmul.mubr.f32.gmra.mrb[0].mxu0 %v646
    %v789 = vpop.f32.mrb[0].mxu0
    %v790 = vadd.f32 0.0, %v789
    %v791 = vpop.f32.mrb[0].mxu0
    %792 = vdwg.mxu0
    %v793 = vmax.f32 %v715, -64.0
    %v794 = vmax.f32 %v720, -64.0
    %v795 = vmax.f32 %v725, -64.0
    %v796 = vmax.f32 %v730, -64.0
    %v797 = vmax.f32 %v735, -64.0
    %v798 = vmax.f32 %v740, -64.0
    %v799 = vmax.f32 %v745, -64.0
    %v800 = vmax.f32 %v750, -64.0
    %v801 = vmax.f32 %v755, -64.0
    %v802 = vmax.f32 %v760, -64.0
    %v803 = vmax.f32 %v765, -64.0
    %v804 = vmax.f32 %v770, -64.0
    %v805 = vmax.f32 %v775, -64.0
    %v806 = vmax.f32 %v780, -64.0
    %v807 = vmax.f32 %v785, -64.0
    %v808 = vmax.f32 %v790, -64.0
    %v809 = vmin.f32 %v793, 64.0
    %v810 = vmin.f32 %v794, 64.0
    %v811 = vmin.f32 %v795, 64.0
    %v812 = vmin.f32 %v796, 64.0
    %v813 = vmin.f32 %v797, 64.0
    %v814 = vmin.f32 %v798, 64.0
    %v815 = vmin.f32 %v799, 64.0
    %v816 = vmin.f32 %v800, 64.0
    %v817 = vmin.f32 %v801, 64.0
    %v818 = vmin.f32 %v802, 64.0
    %v819 = vmin.f32 %v803, 64.0
    %v820 = vmin.f32 %v804, 64.0
    %v821 = vmin.f32 %v805, 64.0
    %v822 = vmin.f32 %v806, 64.0
    %v823 = vmin.f32 %v807, 64.0
    %v824 = vmin.f32 %v808, 64.0
    %v825 = vsub.f32 0.0, %v809
    %v826 = vsub.f32 0.0, %v810
    %v827 = vsub.f32 0.0, %v811
    %v828 = vsub.f32 0.0, %v812
    %v829 = vsub.f32 0.0, %v813
    %v830 = vsub.f32 0.0, %v814
    %v831 = vsub.f32 0.0, %v815
    %v832 = vsub.f32 0.0, %v816
    %v833 = vsub.f32 0.0, %v817
    %v834 = vsub.f32 0.0, %v818
    %v835 = vsub.f32 0.0, %v819
    %v836 = vsub.f32 0.0, %v820
    %v837 = vsub.f32 0.0, %v821
    %v838 = vsub.f32 0.0, %v822
    %v839 = vsub.f32 0.0, %v823
    %v840 = vsub.f32 0.0, %v824
    %v841 = vmul.f32 %v825, 1.442695
    %v842 = vpow.pop %v841
    %v843 = vmul.f32 %v826, 1.442695
    %v844 = vpow.pop %v843
    %v845 = vmul.f32 %v827, 1.442695
    %v846 = vpow.pop %v845
    %v847 = vmul.f32 %v828, 1.442695
    %v848 = vpow.pop %v847
    %v849 = vmul.f32 %v829, 1.442695
    %v850 = vpow.pop %v849
    %v851 = vmul.f32 %v830, 1.442695
    %v852 = vpow.pop %v851
    %v853 = vmul.f32 %v831, 1.442695
    %v854 = vpow.pop %v853
    %v855 = vmul.f32 %v832, 1.442695
    %v856 = vpow.pop %v855
    %v857 = vmul.f32 %v833, 1.442695
    %v858 = vpow.pop %v857
    %v859 = vmul.f32 %v834, 1.442695
    %v860 = vpow.pop %v859
    %v861 = vmul.f32 %v835, 1.442695
    %v862 = vpow.pop %v861
    %v863 = vmul.f32 %v836, 1.442695
    %v864 = vpow.pop %v863
    %v865 = vmul.f32 %v837, 1.442695
    %v866 = vpow.pop %v865
    %v867 = vmul.f32 %v838, 1.442695
    %v868 = vpow.pop %v867
    %v869 = vmul.f32 %v839, 1.442695
    %v870 = vpow.pop %v869
    %v871 = vmul.f32 %v840, 1.442695
    %v872 = vpow.pop %v871
    %v873 = vadd.f32 %v842, 1.0
    %v874 = vadd.f32 %v844, 1.0
    %v875 = vadd.f32 %v846, 1.0
    %v876 = vadd.f32 %v848, 1.0
    %v877 = vadd.f32 %v850, 1.0
    %v878 = vadd.f32 %v852, 1.0
    %v879 = vadd.f32 %v854, 1.0
    %v880 = vadd.f32 %v856, 1.0
    %v881 = vadd.f32 %v858, 1.0
    %v882 = vadd.f32 %v860, 1.0
    %v883 = vadd.f32 %v862, 1.0
    %v884 = vadd.f32 %v864, 1.0
    %v885 = vadd.f32 %v866, 1.0
    %v886 = vadd.f32 %v868, 1.0
    %v887 = vadd.f32 %v870, 1.0
    %v888 = vadd.f32 %v872, 1.0
    %v889 = vrcp.pop %v873
    %v890 = vrcp.pop %v874
    %v891 = vrcp.pop %v875
    %v892 = vrcp.pop %v876
    %v893 = vrcp.pop %v877
    %v894 = vrcp.pop %v878
    %v895 = vrcp.pop %v879
    %v896 = vrcp.pop %v880
    %v897 = vrcp.pop %v881
    %v898 = vrcp.pop %v882
    %v899 = vrcp.pop %v883
    %v900 = vrcp.pop %v884
    %v901 = vrcp.pop %v885
    %v902 = vrcp.pop %v886
    %v903 = vrcp.pop %v887
    %v904 = vrcp.pop %v888
    %v905 = vmul.f32 %v889, 10.0
    %v906 = vmul.f32 %v890, 10.0
    %v907 = vmul.f32 %v891, 10.0
    %v908 = vmul.f32 %v892, 10.0
    %v909 = vmul.f32 %v893, 10.0
    %v910 = vmul.f32 %v894, 10.0
    %v911 = vmul.f32 %v895, 10.0
    %v912 = vmul.f32 %v896, 10.0
    %v913 = vmul.f32 %v897, 10.0
    %v914 = vmul.f32 %v898, 10.0
    %v915 = vmul.f32 %v899, 10.0
    %v916 = vmul.f32 %v900, 10.0
    %v917 = vmul.f32 %v901, 10.0
    %v918 = vmul.f32 %v902, 10.0
    %v919 = vmul.f32 %v903, 10.0
    %v920 = vmul.f32 %v904, 10.0
    %921 = vst [vmem:[#allocation2] sm:$0xff] %v905
    %922 = vst [vmem:[#allocation2 + $0x8] sm:$0xff] %v906
    %923 = vst [vmem:[#allocation2 + $0x10] sm:$0xff] %v907
    %924 = vst [vmem:[#allocation2 + $0x18] sm:$0xff] %v908
    %925 = vst [vmem:[#allocation2 + $0x20] sm:$0xff] %v909
    %926 = vst [vmem:[#allocation2 + $0x28] sm:$0xff] %v910
    %927 = vst [vmem:[#allocation2 + $0x30] sm:$0xff] %v911
    %928 = vst [vmem:[#allocation2 + $0x38] sm:$0xff] %v912
    %929 = vst [vmem:[#allocation2 + $0x40] sm:$0xff] %v913
    %930 = vst [vmem:[#allocation2 + $0x48] sm:$0xff] %v914
    %931 = vst [vmem:[#allocation2 + $0x50] sm:$0xff] %v915
    %932 = vst [vmem:[#allocation2 + $0x58] sm:$0xff] %v916
    %933 = vst [vmem:[#allocation2 + $0x60] sm:$0xff] %v917
    %934 = vst [vmem:[#allocation2 + $0x68] sm:$0xff] %v918
    %935 = vst [vmem:[#allocation2 + $0x70] sm:$0xff] %v919
    %936 = vst [vmem:[#allocation2 + $0x78] sm:$0xff] %v920
    // Predicated region
    $region18: #{tpu_custom_call.1} parent=1 // pred_check
      _
    $region19: #{tpu_custom_call.1} parent=1 // pred_check_branch
      %938 = sbr.rel (0) target = $region21
    $region20: #{tpu_custom_call.1} parent=1 // pred_region
      %s940 = ssub.s32 2048, 2048
      %941 = vsyncadd [#allocation3], %s940
      %s942 = sshll.u32 [#allocation2], 4
      %s943 = int_to_ptr.vmem [resolvable:$true] %s942
      %948 = dma.vmem_to_hbm [thread:$0]  %s943, 2048, %s4, [#allocation3], 128, 128, 8
    $region21: #{tpu_custom_call.1} parent=1 // pred_fallthru
      _
    // Predicated region
    $region22: #{tpu_custom_call.1} parent=1 // pred_check
      _
    $region23: #{tpu_custom_call.1} parent=1 // pred_check_branch
      %950 = sbr.rel (0) target = $region25
    $region24: #{tpu_custom_call.1} parent=1 // pred_region
      %951 = dma.done [#allocation3], 2048
    $region25: #{tpu_custom_call.1} parent=1 // pred_fallthru
      _
    %952 = vsyncpa [#allocation3], 1

</llo_original>
